<compile_context>
chip_gen: v6e
topology: v6e:2x2x1
jax: 0.10.0
libtpu: 0.0.40
codegen_flags: <defaults>
</compile_context>

<pallas_src>
import functools
import math

import jax
import jax.numpy as jnp
from jax.experimental import pallas as pl
from jax.experimental.pallas import tpu as pltpu


def _round_up(x, m):
    return ((x + m - 1) // m) * m


@functools.lru_cache(maxsize=1)
def _vmem_cap_bytes():
    """Generation-aware VMEM cap (75% of physical VMEM per TensorCore)."""
    try:
        cap = int(pltpu.get_tpu_info().vmem_capacity_bytes)
    except Exception:
        cap = 64 << 20  # conservative: v7x per-TC physical VMEM
    return int(cap * 0.75)  # 128 MiB -> 96 MiB (v5e/v6e), 64 MiB -> 48 MiB (v7x)


def _gelu_linear_kernel(x_ref, w_ref, b_ref, o_ref, acc_ref, *, precision):
    k = pl.program_id(2)

    @pl.when(k == 0)
    def _():
        acc_ref[...] = jnp.zeros_like(acc_ref)

    # MXU matmul, f32 accumulation, explicit precision (HIGHEST = torch-f32
    # parity; DEFAULT = bf16 passes, 3-6x faster when compute-bound).
    acc_ref[...] += jnp.dot(
        x_ref[...],
        w_ref[...],
        preferred_element_type=jnp.float32,
        precision=precision,
    )

    @pl.when(k == pl.num_programs(2) - 1)
    def _():
        y = acc_ref[...] + b_ref[...]  # (1, bn) broadcasts over (bm, bn)
        # Exact GELU (matches torch.nn.GELU(approximate='none')):
        #   0.5 * y * (1 + erf(y / sqrt(2)))
        out = 0.5 * y * (1.0 + jax.lax.erf(y * (1.0 / math.sqrt(2.0))))
        o_ref[...] = out.astype(o_ref.dtype)


def _kn_tiles(Din, Dout, block_n, block_k):
    """Tile sizes / padded extents for the weight, independent of batch."""
    bn = min(block_n, _round_up(Dout, 128))
    bk = min(block_k, _round_up(Din, 128))
    return bn, bk, _round_up(Din, bk), _round_up(Dout, bn)


def prepare_gelu_layer_params(w_t, b, *, block_n=512, block_k=1024):
    """Pad parameters ONCE (outside the per-call forward).

    w_t: (in_features, out_features) -- weight stored transposed.
    b:   (out_features,)
    Returns (w_p, b_p) padded to tile multiples; zero padding is exact.
    """
    Din, Dout = w_t.shape
    _, _, K_pad, N_pad = _kn_tiles(Din, Dout, block_n, block_k)
    if (K_pad, N_pad) != (Din, Dout):
        w_p = jnp.pad(w_t, ((0, K_pad - Din), (0, N_pad - Dout)))
    else:
        w_p = w_t
    b_p = jnp.pad(b.reshape(1, Dout), ((0, 0), (0, N_pad - Dout)))
    return w_p, b_p


@functools.partial(
    jax.jit,
    static_argnames=("out_features", "block_m", "block_n", "block_k", "precision"),
)
def gelu_layer(
    x,
    w_p,
    b_p,
    *,
    out_features,
    block_m=512,
    block_n=512,
    block_k=1024,
    precision=jax.lax.Precision.HIGHEST,
):
    """x: (B, in_features); w_p/b_p pre-padded by prepare_gelu_layer_params."""
    B, Din = x.shape
    K_pad, N_pad = w_p.shape
    in_item = jnp.dtype(x.dtype).itemsize
    out_item = in_item

    # Sublane alignment for the M tile (8 for f32, 16 for packed 16-bit).
    m_align = 8 if in_item >= 4 else 16

    bm = min(block_m, _round_up(B, m_align))
    # These reproduce exactly the bn/bk used when padding the parameters.
    bn = min(block_n, N_pad)
    bk = min(block_k, K_pad)

    M_pad = _round_up(B, bm)

    # Megacore heuristic (v7x has 2 TCs; "parallel" axes shard across them):
    # if the whole output is a single (M, N) block, split N so both cores
    # get work. Zero cost on single-TC v5e/v6e.
    if (M_pad // bm) * (N_pad // bn) < 2 and N_pad >= 256:
        cand = (min(bn, N_pad // 2) // 128) * 128
        while cand >= 128:
            if N_pad % cand == 0:
                bn = cand
                break
            cand -= 128

    # Pad x only (parameters were padded once at prepare time); skip when exact.
    if (M_pad, K_pad) != (B, Din):
        x_p = jnp.pad(x, ((0, M_pad - B), (0, K_pad - Din)))
    else:
        x_p = x

    grid = (M_pad // bm, N_pad // bn, K_pad // bk)

    # VMEM working set (no double-counting): double-buffered x/w/out tiles,
    # f32 accumulator scratch, bias. Capped by the generation's physical VMEM.
    tile_bytes = (
        2 * (bm * bk + bk * bn) * in_item  # double-buffered input tiles
        + 2 * bm * bn * out_item           # double-buffered output tile
        + bm * bn * 4                      # f32 accumulator
        + 2 * bn * in_item                 # bias (negligible)
    )
    vmem_limit = min(max(tile_bytes + (4 << 20), 32 << 20), _vmem_cap_bytes())

    cost = pl.CostEstimate(
        flops=2 * B * Din * out_features,
        transcendentals=B * out_features,
        bytes_accessed=(B * Din + Din * out_features + out_features
                        + B * out_features) * in_item,
    )

    kernel = functools.partial(_gelu_linear_kernel, precision=precision)

    out_padded = pl.pallas_call(
        kernel,
        out_shape=jax.ShapeDtypeStruct((M_pad, N_pad), x.dtype),
        grid_spec=pltpu.PrefetchScalarGridSpec(
            num_scalar_prefetch=0,
            grid=grid,
            in_specs=[
                pl.BlockSpec((bm, bk), lambda i, j, k: (i, k)),
                pl.BlockSpec((bk, bn), lambda i, j, k: (k, j)),
                pl.BlockSpec((1, bn), lambda i, j, k: (0, j)),
            ],
            out_specs=pl.BlockSpec((bm, bn), lambda i, j, k: (i, j)),
            scratch_shapes=[pltpu.VMEM((bm, bn), jnp.float32)],
        ),
        compiler_params=pltpu.CompilerParams(
            dimension_semantics=("parallel", "parallel", "arbitrary"),
            vmem_limit_bytes=vmem_limit,
        ),
        cost_estimate=cost,
    )(x_p, w_p, b_p)

    return out_padded[:B, :out_features]


def init_gelu_layer_params(key, in_features, out_features, dtype=jnp.float32):
    """Matches the PyTorch module's __init__ semantics:
    weight ~ U(-1/in_features, 1/in_features)             (explicit override)
    bias   ~ U(-1/sqrt(in_features), 1/sqrt(in_features)) (nn.Linear default)
    Weight is returned transposed (in_features, out_features) so the kernel
    computes x @ W, which equals torch's x @ W^T.
    """
    kw, kb = jax.random.split(key)
    w = jax.random.uniform(
        kw, (out_features, in_features), dtype=dtype,
        minval=-1.0 / in_features, maxval=1.0 / in_features)
    bound = 1.0 / math.sqrt(in_features)
    b = jax.random.uniform(
        kb, (out_features,), dtype=dtype, minval=-bound, maxval=bound)
    return w.T, b


def _reference(x, w_t, b):
    y = jnp.dot(x, w_t, precision=jax.lax.Precision.HIGHEST) + b
    return 0.5 * y * (1.0 + jax.lax.erf(y / jnp.sqrt(2.0)))


if __name__ == "__main__":
    key = jax.random.PRNGKey(0)
    k_param, k_x = jax.random.split(key)

    # Small shapes consistent with the module's forward.
    batch, in_features, out_features = 8, 32, 16
    w_t, b = init_gelu_layer_params(k_param, in_features, out_features)
    w_p, b_p = prepare_gelu_layer_params(w_t, b)
    x = jax.random.normal(k_x, (batch, in_features), dtype=jnp.float32)

    out = gelu_layer(x, w_p, b_p, out_features=out_features)
    out = jax.block_until_ready(out)

    ref = _reference(x, w_t, b)
    assert out.shape == (batch, out_features)
    assert jnp.allclose(out, ref, atol=1e-5, rtol=1e-5), "mismatch vs reference"

    # Larger, tile-spanning problem: multi-block K (accumulator path),
    # multi-block N (megacore split heuristic), padded M/N remainders.
    k2, k3 = jax.random.split(k_x)
    B2, Din2, Dout2 = 256, 2048, 384
    w2_t, b2 = init_gelu_layer_params(k2, Din2, Dout2)
    w2_p, b2_p = prepare_gelu_layer_params(w2_t, b2)
    x2 = jax.random.normal(k3, (B2, Din2), dtype=jnp.float32)
    out2 = jax.block_until_ready(gelu_layer(x2, w2_p, b2_p, out_features=Dout2))
    ref2 = _reference(x2, w2_t, b2)
    assert out2.shape == (B2, Dout2)
    assert jnp.allclose(out2, ref2, atol=1e-5, rtol=1e-4), "mismatch (large) vs reference"

    print("KERNEL_OK")
</pallas_src>

<mosaic_0001>
module attributes {stable_mosaic.version = 11 : i64} {
  func.func @_gelu_linear_kernel(%arg0: i32, %arg1: i32, %arg2: i32, %arg3: memref<8x128xf32, #tpu.memory_space<vmem>>, %arg4: memref<128x128xf32, #tpu.memory_space<vmem>>, %arg5: memref<1x128xf32, #tpu.memory_space<vmem>>, %arg6: memref<8x128xf32, #tpu.memory_space<vmem>>, %arg7: memref<8x128xf32, #tpu.memory_space<vmem>>) attributes {dimension_semantics = [#tpu.dimension_semantics<parallel>, #tpu.dimension_semantics<parallel>, #tpu.dimension_semantics<arbitrary>], iteration_bounds = array<i64: 1, 1, 1>, scalar_prefetch = 0 : i64, scratch_operands = 1 : i64, tpu.core_type = #tpu.core_type<tc>, window_params = [{transform_indices = @transform_0, window_bounds = array<i64: 8, 128>}, {transform_indices = @transform_1, window_bounds = array<i64: 128, 128>}, {transform_indices = @transform_2, window_bounds = array<i64: 1, 128>}, {transform_indices = @transform_3, window_bounds = array<i64: 8, 128>}]} {
    %c0_i32 = arith.constant 0 : i32
    %0 = arith.cmpi eq, %arg2, %c0_i32 : i32
    %1 = arith.extui %0 : i1 to i32
    %c0_i32_0 = arith.constant 0 : i32
    %2 = arith.cmpi ne, %1, %c0_i32_0 : i32
    scf.if %2 {
      %cst_10 = arith.constant 0.000000e+00 : f32
      %12 = vector.broadcast %cst_10 : f32 to vector<8x128xf32>
      %c0_11 = arith.constant 0 : index
      %c0_12 = arith.constant 0 : index
      %13 = vector.load %arg7[%c0_11, %c0_12] : memref<8x128xf32, #tpu.memory_space<vmem>>, vector<8x128xf32>
      tpu.vector_store %arg7[%c0_11, %c0_12], %12 {strides = array<i32>} : memref<8x128xf32, #tpu.memory_space<vmem>>, vector<8x128xf32>,
    } else {
    }
    %c0 = arith.constant 0 : index
    %c0_1 = arith.constant 0 : index
    %3 = vector.load %arg7[%c0, %c0_1] : memref<8x128xf32, #tpu.memory_space<vmem>>, vector<8x128xf32>
    %c0_2 = arith.constant 0 : index
    %c0_3 = arith.constant 0 : index
    %4 = vector.load %arg3[%c0_2, %c0_3] : memref<8x128xf32, #tpu.memory_space<vmem>>, vector<8x128xf32>
    %c0_4 = arith.constant 0 : index
    %c0_5 = arith.constant 0 : index
    %5 = vector.load %arg4[%c0_4, %c0_5] : memref<128x128xf32, #tpu.memory_space<vmem>>, vector<128x128xf32>
    %cst = arith.constant dense<0.000000e+00> : vector<8x128xf32>
    %6 = tpu.matmul %4, %5, %cst {dimension_numbers = #tpu.dot_dimension_numbers<[1], [0], [0], [1], [0, 0, 1, 1], [], []>, precision = #tpu.contract_precision<fp32>} : vector<8x128xf32>, vector<128x128xf32>, vector<8x128xf32> -> vector<8x128xf32>
    %7 = arith.addf %3, %6 : vector<8x128xf32>
    %c0_6 = arith.constant 0 : index
    %c0_7 = arith.constant 0 : index
    %8 = vector.load %arg7[%c0_6, %c0_7] : memref<8x128xf32, #tpu.memory_space<vmem>>, vector<8x128xf32>
    tpu.vector_store %arg7[%c0_6, %c0_7], %7 {strides = array<i32>} : memref<8x128xf32, #tpu.memory_space<vmem>>, vector<8x128xf32>,
    %c0_i32_8 = arith.constant 0 : i32
    %9 = arith.cmpi eq, %arg2, %c0_i32_8 : i32
    %10 = arith.extui %9 : i1 to i32
    %c0_i32_9 = arith.constant 0 : i32
    %11 = arith.cmpi ne, %10, %c0_i32_9 : i32
    scf.if %11 {
      %c0_10 = arith.constant 0 : index
      %c0_11 = arith.constant 0 : index
      %12 = vector.load %arg7[%c0_10, %c0_11] : memref<8x128xf32, #tpu.memory_space<vmem>>, vector<8x128xf32>
      %c0_12 = arith.constant 0 : index
      %c0_13 = arith.constant 0 : index
      %13 = vector.load %arg5[%c0_12, %c0_13] : memref<1x128xf32, #tpu.memory_space<vmem>>, vector<1x128xf32>
      %14 = vector.broadcast %13 : vector<1x128xf32> to vector<8x128xf32>
      %15 = arith.addf %12, %14 : vector<8x128xf32>
      %cst_14 = arith.constant 5.000000e-01 : f32
      %16 = vector.broadcast %cst_14 : f32 to vector<8x128xf32>
      %17 = arith.mulf %16, %15 : vector<8x128xf32>
      %cst_15 = arith.constant 0.707106769 : f32
      %18 = vector.broadcast %cst_15 : f32 to vector<8x128xf32>
      %19 = arith.mulf %15, %18 : vector<8x128xf32>
      %20 = math.erf %19 : vector<8x128xf32>
      %cst_16 = arith.constant 1.000000e+00 : f32
      %21 = vector.broadcast %cst_16 : f32 to vector<8x128xf32>
      %22 = arith.addf %21, %20 : vector<8x128xf32>
      %23 = arith.mulf %17, %22 : vector<8x128xf32>
      %c0_17 = arith.constant 0 : index
      %c0_18 = arith.constant 0 : index
      %24 = vector.load %arg6[%c0_17, %c0_18] : memref<8x128xf32, #tpu.memory_space<vmem>>, vector<8x128xf32>
      tpu.vector_store %arg6[%c0_17, %c0_18], %23 {strides = array<i32>} : memref<8x128xf32, #tpu.memory_space<vmem>>, vector<8x128xf32>,
    } else {
    }
    return
  }
  func.func @transform_0(%arg0: i32, %arg1: i32, %arg2: i32) -> (i32, i32) {
    %c0_i32 = arith.constant 0 : i32
    return %arg0, %arg2 : i32, i32
  }
  func.func @transform_1(%arg0: i32, %arg1: i32, %arg2: i32) -> (i32, i32) {
    %c0_i32 = arith.constant 0 : i32
    return %arg2, %arg1 : i32, i32
  }
  func.func @transform_2(%arg0: i32, %arg1: i32, %arg2: i32) -> (i32, i32) {
    %c0_i32 = arith.constant 0 : i32
    %c0_i32_0 = arith.constant 0 : i32
    return %c0_i32, %arg1 : i32, i32
  }
  func.func @transform_3(%arg0: i32, %arg1: i32, %arg2: i32) -> (i32, i32) {
    %c0_i32 = arith.constant 0 : i32
    return %arg0, %arg1 : i32, i32
  }
}

</mosaic_0001>

<llo_original>
// kernel: gelu_layer.1
$region0: #{gelu_layer.1}
  #allocation0 [shape = 'u32[]', space=smem, size = 0x4, offset = 0x4, fixed_abs, tag = 'smem constant byte address 0x4 - core index']
  #allocation1 [shape = 'u32[144,128]{1,0:T(1,128)}', space=vmem, size = 0x12000, scoped, tag = 'internal scratch']
  #allocation2 [shape = 'f32[8,128]{1,0:T(8,128)}', space=vmem, size = 0x1000, scoped, tag = 'scratch operand']
  %s0 = inlined_call_operand.vmem [shape: f32[8,128], index: 0, kind: input, shape index: {}]
  %s1 = inlined_call_operand.hbm [shape: f32[128,128], index: 1, kind: input, shape index: {}]
  %s2 = inlined_call_operand.vmem [shape: f32[1,128], index: 2, kind: input, shape index: {}]
  %s3 = inlined_call_operand.hbm [shape: f32[8,128], index: 3, kind: output, shape index: {}]
  %s4 = sld [smem:[#allocation0]]
  $region34: #{gelu_layer.1} parent=0
    _
  %s6 = ssub.s32 1, %s4
  %s7 = scalar_select 0, %s6, %s4
  $region1: #{gelu_layer.1} parent=0
    #allocation3 [shape = 'u8[65536]{0}', space=vmem, size = 0x10000, scoped, tag = 'input window, operand 1, single buffered']
    #allocation4 [shape = 's32[1]{0}', space=sflag, size = 0x4, scoped, tag = 'scoped memory for gelu_layer.1']
    #allocation5 [shape = 's32[1]{0}', space=sflag, size = 0x4, scoped, tag = 'scoped memory for gelu_layer.1']
    #allocation6 [shape = 'u8[4096]{0}', space=vmem, size = 0x1000, scoped, tag = 'output window, operand 0, single buffered']
    %8 = vsyncpa [#allocation4], 0
    %9 = vsyncpa [#allocation5], 0
    // Predicated region
    $region2: #{gelu_layer.1} parent=1 // pred_check
      _
    $region3: #{gelu_layer.1} parent=1 // pred_check_branch
      %11 = sbr.rel (0) target = $region5
    $region4: #{gelu_layer.1} parent=1 // pred_region
      _
    $region5: #{gelu_layer.1} parent=1 // pred_fallthru
      _
    // Predicated region
    $region6: #{gelu_layer.1} parent=1 // pred_check
      _
    $region7: #{gelu_layer.1} parent=1 // pred_check_branch
      %13 = sbr.rel (0) target = $region9
    $region8: #{gelu_layer.1} parent=1 // pred_region
      %s15 = ssub.s32 2048, 2048
      %16 = vsyncadd [#allocation4], %s15
      %s17 = sshll.u32 [#allocation3], 4
      %s18 = int_to_ptr.vmem [resolvable:$true] %s17
      %23 = dma.hbm_to_vmem [thread:$0]  %s1, 2048, %s18, [#allocation4], 128, 128, 8
    $region9: #{gelu_layer.1} parent=1 // pred_fallthru
      _
    // Predicated region
    $region10: #{gelu_layer.1} parent=1 // pred_check
      _
    $region11: #{gelu_layer.1} parent=1 // pred_check_branch
      %25 = sbr.rel (0) target = $region13
    $region12: #{gelu_layer.1} parent=1 // pred_region
      _
    $region13: #{gelu_layer.1} parent=1 // pred_fallthru
      _
    // Predicated region
    $region14: #{gelu_layer.1} parent=1 // pred_check
      _
    $region15: #{gelu_layer.1} parent=1 // pred_check_branch
      %27 = sbr.rel (0) target = $region17
    $region16: #{gelu_layer.1} parent=1 // pred_region
      %28 = dma.done [#allocation4], 2048
    $region17: #{gelu_layer.1} parent=1 // pred_fallthru
      _
    %p29 = scmp.eq.s32.totalorder 0, 0
    // Predicated region
    $region18: #{gelu_layer.1} parent=1 // pred_check
      %p30 = pneg %p29
    $region19: #{gelu_layer.1} parent=1 // pred_check_branch
      %32 = sbr.rel (%p30) target = $region21
    $region20: #{gelu_layer.1} parent=1 // pred_region
      %33 = vst [vmem:[#allocation2] sm:$0xff] 0.0
    $region21: #{gelu_layer.1} parent=1 // pred_fallthru
      _
    %v34 = vld [vmem:[#allocation2] sm:$0xff]
    %v35 = vld [vmem:[%s0] sm:$0xff]
    %v36 = vld [vmem:[#allocation3] sm:$0xff]
    %v37 = vld [vmem:[#allocation3 + $0x8] sm:$0xff]
    %v38 = vld [vmem:[#allocation3 + $0x10] sm:$0xff]
    %v39 = vld [vmem:[#allocation3 + $0x18] sm:$0xff]
    %v40 = vld [vmem:[#allocation3 + $0x20] sm:$0xff]
    %v41 = vld [vmem:[#allocation3 + $0x28] sm:$0xff]
    %v42 = vld [vmem:[#allocation3 + $0x30] sm:$0xff]
    %v43 = vld [vmem:[#allocation3 + $0x38] sm:$0xff]
    %v44 = vld [vmem:[#allocation3 + $0x40] sm:$0xff]
    %v45 = vld [vmem:[#allocation3 + $0x48] sm:$0xff]
    %v46 = vld [vmem:[#allocation3 + $0x50] sm:$0xff]
    %v47 = vld [vmem:[#allocation3 + $0x58] sm:$0xff]
    %v48 = vld [vmem:[#allocation3 + $0x60] sm:$0xff]
    %v49 = vld [vmem:[#allocation3 + $0x68] sm:$0xff]
    %v50 = vld [vmem:[#allocation3 + $0x70] sm:$0xff]
    %v51 = vld [vmem:[#allocation3 + $0x78] sm:$0xff]
    %52 = vmatprep.subr.mxu0 0.0
    %v53 = vand.u32 %v51, 4294901760
    %54 = vmatpush1.msra.mxu0 %v53
    %55 = vmatprep.subr.mxu0 0.0
    %v56 = vand.u32 %v50, 4294901760
    %57 = vmatpush1.msra.mxu0 %v56
    %58 = vmatprep.subr.mxu0 0.0
    %v59 = vand.u32 %v49, 4294901760
    %60 = vmatpush1.msra.mxu0 %v59
    %61 = vmatprep.subr.mxu0 0.0
    %v62 = vand.u32 %v48, 4294901760
    %63 = vmatpush1.msra.mxu0 %v62
    %64 = vmatprep.subr.mxu0 0.0
    %v65 = vand.u32 %v47, 4294901760
    %66 = vmatpush1.msra.mxu0 %v65
    %67 = vmatprep.subr.mxu0 0.0
    %v68 = vand.u32 %v46, 4294901760
    %69 = vmatpush1.msra.mxu0 %v68
    %70 = vmatprep.subr.mxu0 0.0
    %v71 = vand.u32 %v45, 4294901760
    %72 = vmatpush1.msra.mxu0 %v71
    %73 = vmatprep.subr.mxu0 0.0
    %v74 = vand.u32 %v44, 4294901760
    %75 = vmatpush1.msra.mxu0 %v74
    %76 = vmatprep.subr.mxu0 0.0
    %v77 = vand.u32 %v43, 4294901760
    %78 = vmatpush1.msra.mxu0 %v77
    %79 = vmatprep.subr.mxu0 0.0
    %v80 = vand.u32 %v42, 4294901760
    %81 = vmatpush1.msra.mxu0 %v80
    %82 = vmatprep.subr.mxu0 0.0
    %v83 = vand.u32 %v41, 4294901760
    %84 = vmatpush1.msra.mxu0 %v83
    %85 = vmatprep.subr.mxu0 0.0
    %v86 = vand.u32 %v40, 4294901760
    %87 = vmatpush1.msra.mxu0 %v86
    %88 = vmatprep.subr.mxu0 0.0
    %v89 = vand.u32 %v39, 4294901760
    %90 = vmatpush1.msra.mxu0 %v89
    %91 = vmatprep.subr.mxu0 0.0
    %v92 = vand.u32 %v38, 4294901760
    %93 = vmatpush1.msra.mxu0 %v92
    %94 = vmatprep.subr.mxu0 0.0
    %v95 = vand.u32 %v37, 4294901760
    %96 = vmatpush1.msra.mxu0 %v95
    %97 = vmatprep.subr.mxu0 0.0
    %v98 = vand.u32 %v36, 4294901760
    %99 = vmatpush1.msra.mxu0 %v98
    %100 = vmatprep.subr.mxu0 0.0
    %101 = vmatpush2.msra.mxu0 0.0
    %102 = vmatprep.subr.mxu0 0.0
    %103 = vmatpush2.msra.mxu0 0.0
    %104 = vmatprep.subr.mxu0 0.0
    %105 = vmatpush2.msra.mxu0 0.0
    %106 = vmatprep.subr.mxu0 0.0
    %107 = vmatpush2.msra.mxu0 0.0
    %108 = vmatprep.subr.mxu0 0.0
    %109 = vmatpush2.msra.mxu0 0.0
    %110 = vmatprep.subr.mxu0 0.0
    %111 = vmatpush2.msra.mxu0 0.0
    %112 = vmatprep.subr.mxu0 0.0
    %113 = vmatpush2.msra.mxu0 0.0
    %114 = vmatprep.subr.mxu0 0.0
    %115 = vmatpush2.msra.mxu0 0.0
    %116 = vmatprep.subr.mxu0 0.0
    %117 = vmatpush2.msra.mxu0 0.0
    %118 = vmatprep.subr.mxu0 0.0
    %119 = vmatpush2.msra.mxu0 0.0
    %120 = vmatprep.subr.mxu0 0.0
    %121 = vmatpush2.msra.mxu0 0.0
    %122 = vmatprep.subr.mxu0 0.0
    %123 = vmatpush2.msra.mxu0 0.0
    %124 = vmatprep.subr.mxu0 0.0
    %125 = vmatpush2.msra.mxu0 0.0
    %126 = vmatprep.subr.mxu0 0.0
    %127 = vmatpush2.msra.mxu0 0.0
    %128 = vmatprep.subr.mxu0 0.0
    %129 = vmatpush2.msra.mxu0 0.0
    %130 = vmatprep.subr.mxu0 0.0
    %131 = vmatpush2.msra.mxu0 0.0
    %132 = vmatprep.mubr.f32.mxu0 0.0
    %v133 = vand.u32 %v35, 4294901760
    %v134 = vsub.f32 %v35, %v133
    %v135 = vand.u32 %v134, 4294901760
    %v136 = vsub.f32 %v134, %v135
    %v137 = vand.u32 %v136, 4294901760
    %138 = vmatmul.mubr.f32.gmra.mxu0 %v137
    %v139 = vpop.f32.mrf.mxu0
    %v140 = vadd.f32 0.0, %v139
    %v141 = vpop.f32.mrf.mxu0
    %142 = vdwg.mxu0
    %143 = vmatprep.subr.mxu0 0.0
    %v144 = vand.u32 %v51, 4294901760
    %v145 = vsub.f32 %v51, %v144
    %v146 = vand.u32 %v145, 4294901760
    %v147 = vsub.f32 %v145, %v146
    %v148 = vand.u32 %v147, 4294901760
    %149 = vmatpush1.msra.mxu0 %v148
    %150 = vmatprep.subr.mxu0 0.0
    %v151 = vand.u32 %v50, 4294901760
    %v152 = vsub.f32 %v50, %v151
    %v153 = vand.u32 %v152, 4294901760
    %v154 = vsub.f32 %v152, %v153
    %v155 = vand.u32 %v154, 4294901760
    %156 = vmatpush1.msra.mxu0 %v155
    %157 = vmatprep.subr.mxu0 0.0
    %v158 = vand.u32 %v49, 4294901760
    %v159 = vsub.f32 %v49, %v158
    %v160 = vand.u32 %v159, 4294901760
    %v161 = vsub.f32 %v159, %v160
    %v162 = vand.u32 %v161, 4294901760
    %163 = vmatpush1.msra.mxu0 %v162
    %164 = vmatprep.subr.mxu0 0.0
    %v165 = vand.u32 %v48, 4294901760
    %v166 = vsub.f32 %v48, %v165
    %v167 = vand.u32 %v166, 4294901760
    %v168 = vsub.f32 %v166, %v167
    %v169 = vand.u32 %v168, 4294901760
    %170 = vmatpush1.msra.mxu0 %v169
    %171 = vmatprep.subr.mxu0 0.0
    %v172 = vand.u32 %v47, 4294901760
    %v173 = vsub.f32 %v47, %v172
    %v174 = vand.u32 %v173, 4294901760
    %v175 = vsub.f32 %v173, %v174
    %v176 = vand.u32 %v175, 4294901760
    %177 = vmatpush1.msra.mxu0 %v176
    %178 = vmatprep.subr.mxu0 0.0
    %v179 = vand.u32 %v46, 4294901760
    %v180 = vsub.f32 %v46, %v179
    %v181 = vand.u32 %v180, 4294901760
    %v182 = vsub.f32 %v180, %v181
    %v183 = vand.u32 %v182, 4294901760
    %184 = vmatpush1.msra.mxu0 %v183
    %185 = vmatprep.subr.mxu0 0.0
    %v186 = vand.u32 %v45, 4294901760
    %v187 = vsub.f32 %v45, %v186
    %v188 = vand.u32 %v187, 4294901760
    %v189 = vsub.f32 %v187, %v188
    %v190 = vand.u32 %v189, 4294901760
    %191 = vmatpush1.msra.mxu0 %v190
    %192 = vmatprep.subr.mxu0 0.0
    %v193 = vand.u32 %v44, 4294901760
    %v194 = vsub.f32 %v44, %v193
    %v195 = vand.u32 %v194, 4294901760
    %v196 = vsub.f32 %v194, %v195
    %v197 = vand.u32 %v196, 4294901760
    %198 = vmatpush1.msra.mxu0 %v197
    %199 = vmatprep.subr.mxu0 0.0
    %v200 = vand.u32 %v43, 4294901760
    %v201 = vsub.f32 %v43, %v200
    %v202 = vand.u32 %v201, 4294901760
    %v203 = vsub.f32 %v201, %v202
    %v204 = vand.u32 %v203, 4294901760
    %205 = vmatpush1.msra.mxu0 %v204
    %206 = vmatprep.subr.mxu0 0.0
    %v207 = vand.u32 %v42, 4294901760
    %v208 = vsub.f32 %v42, %v207
    %v209 = vand.u32 %v208, 4294901760
    %v210 = vsub.f32 %v208, %v209
    %v211 = vand.u32 %v210, 4294901760
    %212 = vmatpush1.msra.mxu0 %v211
    %213 = vmatprep.subr.mxu0 0.0
    %v214 = vand.u32 %v41, 4294901760
    %v215 = vsub.f32 %v41, %v214
    %v216 = vand.u32 %v215, 4294901760
    %v217 = vsub.f32 %v215, %v216
    %v218 = vand.u32 %v217, 4294901760
    %219 = vmatpush1.msra.mxu0 %v218
    %220 = vmatprep.subr.mxu0 0.0
    %v221 = vand.u32 %v40, 4294901760
    %v222 = vsub.f32 %v40, %v221
    %v223 = vand.u32 %v222, 4294901760
    %v224 = vsub.f32 %v222, %v223
    %v225 = vand.u32 %v224, 4294901760
    %226 = vmatpush1.msra.mxu0 %v225
    %227 = vmatprep.subr.mxu0 0.0
    %v228 = vand.u32 %v39, 4294901760
    %v229 = vsub.f32 %v39, %v228
    %v230 = vand.u32 %v229, 4294901760
    %v231 = vsub.f32 %v229, %v230
    %v232 = vand.u32 %v231, 4294901760
    %233 = vmatpush1.msra.mxu0 %v232
    %234 = vmatprep.subr.mxu0 0.0
    %v235 = vand.u32 %v38, 4294901760
    %v236 = vsub.f32 %v38, %v235
    %v237 = vand.u32 %v236, 4294901760
    %v238 = vsub.f32 %v236, %v237
    %v239 = vand.u32 %v238, 4294901760
    %240 = vmatpush1.msra.mxu0 %v239
    %241 = vmatprep.subr.mxu0 0.0
    %v242 = vand.u32 %v37, 4294901760
    %v243 = vsub.f32 %v37, %v242
    %v244 = vand.u32 %v243, 4294901760
    %v245 = vsub.f32 %v243, %v244
    %v246 = vand.u32 %v245, 4294901760
    %247 = vmatpush1.msra.mxu0 %v246
    %248 = vmatprep.subr.mxu0 0.0
    %v249 = vand.u32 %v36, 4294901760
    %v250 = vsub.f32 %v36, %v249
    %v251 = vand.u32 %v250, 4294901760
    %v252 = vsub.f32 %v250, %v251
    %v253 = vand.u32 %v252, 4294901760
    %254 = vmatpush1.msra.mxu0 %v253
    %255 = vmatprep.subr.mxu0 0.0
    %256 = vmatpush2.msra.mxu0 0.0
    %257 = vmatprep.subr.mxu0 0.0
    %258 = vmatpush2.msra.mxu0 0.0
    %259 = vmatprep.subr.mxu0 0.0
    %260 = vmatpush2.msra.mxu0 0.0
    %261 = vmatprep.subr.mxu0 0.0
    %262 = vmatpush2.msra.mxu0 0.0
    %263 = vmatprep.subr.mxu0 0.0
    %264 = vmatpush2.msra.mxu0 0.0
    %265 = vmatprep.subr.mxu0 0.0
    %266 = vmatpush2.msra.mxu0 0.0
    %267 = vmatprep.subr.mxu0 0.0
    %268 = vmatpush2.msra.mxu0 0.0
    %269 = vmatprep.subr.mxu0 0.0
    %270 = vmatpush2.msra.mxu0 0.0
    %271 = vmatprep.subr.mxu0 0.0
    %272 = vmatpush2.msra.mxu0 0.0
    %273 = vmatprep.subr.mxu0 0.0
    %274 = vmatpush2.msra.mxu0 0.0
    %275 = vmatprep.subr.mxu0 0.0
    %276 = vmatpush2.msra.mxu0 0.0
    %277 = vmatprep.subr.mxu0 0.0
    %278 = vmatpush2.msra.mxu0 0.0
    %279 = vmatprep.subr.mxu0 0.0
    %280 = vmatpush2.msra.mxu0 0.0
    %281 = vmatprep.subr.mxu0 0.0
    %282 = vmatpush2.msra.mxu0 0.0
    %283 = vmatprep.subr.mxu0 0.0
    %284 = vmatpush2.msra.mxu0 0.0
    %285 = vmatprep.subr.mxu0 0.0
    %286 = vmatpush2.msra.mxu0 0.0
    %287 = vmatprep.mubr.f32.mxu0 0.0
    %v288 = vand.u32 %v35, 4294901760
    %289 = vmatmul.mubr.f32.gmra.mxu0 %v288
    %v290 = vpop.f32.mrf.mxu0
    %v291 = vadd.f32 %v140, %v290
    %v292 = vpop.f32.mrf.mxu0
    %293 = vdwg.mxu0
    %294 = vmatprep.subr.mxu0 0.0
    %v295 = vand.u32 %v51, 4294901760
    %v296 = vsub.f32 %v51, %v295
    %297 = vmatpush1.msra.mxu0 %v296
    %298 = vmatprep.subr.mxu0 0.0
    %v299 = vand.u32 %v50, 4294901760
    %v300 = vsub.f32 %v50, %v299
    %301 = vmatpush1.msra.mxu0 %v300
    %302 = vmatprep.subr.mxu0 0.0
    %v303 = vand.u32 %v49, 4294901760
    %v304 = vsub.f32 %v49, %v303
    %305 = vmatpush1.msra.mxu0 %v304
    %306 = vmatprep.subr.mxu0 0.0
    %v307 = vand.u32 %v48, 4294901760
    %v308 = vsub.f32 %v48, %v307
    %309 = vmatpush1.msra.mxu0 %v308
    %310 = vmatprep.subr.mxu0 0.0
    %v311 = vand.u32 %v47, 4294901760
    %v312 = vsub.f32 %v47, %v311
    %313 = vmatpush1.msra.mxu0 %v312
    %314 = vmatprep.subr.mxu0 0.0
    %v315 = vand.u32 %v46, 4294901760
    %v316 = vsub.f32 %v46, %v315
    %317 = vmatpush1.msra.mxu0 %v316
    %318 = vmatprep.subr.mxu0 0.0
    %v319 = vand.u32 %v45, 4294901760
    %v320 = vsub.f32 %v45, %v319
    %321 = vmatpush1.msra.mxu0 %v320
    %322 = vmatprep.subr.mxu0 0.0
    %v323 = vand.u32 %v44, 4294901760
    %v324 = vsub.f32 %v44, %v323
    %325 = vmatpush1.msra.mxu0 %v324
    %326 = vmatprep.subr.mxu0 0.0
    %v327 = vand.u32 %v43, 4294901760
    %v328 = vsub.f32 %v43, %v327
    %329 = vmatpush1.msra.mxu0 %v328
    %330 = vmatprep.subr.mxu0 0.0
    %v331 = vand.u32 %v42, 4294901760
    %v332 = vsub.f32 %v42, %v331
    %333 = vmatpush1.msra.mxu0 %v332
    %334 = vmatprep.subr.mxu0 0.0
    %v335 = vand.u32 %v41, 4294901760
    %v336 = vsub.f32 %v41, %v335
    %337 = vmatpush1.msra.mxu0 %v336
    %338 = vmatprep.subr.mxu0 0.0
    %v339 = vand.u32 %v40, 4294901760
    %v340 = vsub.f32 %v40, %v339
    %341 = vmatpush1.msra.mxu0 %v340
    %342 = vmatprep.subr.mxu0 0.0
    %v343 = vand.u32 %v39, 4294901760
    %v344 = vsub.f32 %v39, %v343
    %345 = vmatpush1.msra.mxu0 %v344
    %346 = vmatprep.subr.mxu0 0.0
    %v347 = vand.u32 %v38, 4294901760
    %v348 = vsub.f32 %v38, %v347
    %349 = vmatpush1.msra.mxu0 %v348
    %350 = vmatprep.subr.mxu0 0.0
    %v351 = vand.u32 %v37, 4294901760
    %v352 = vsub.f32 %v37, %v351
    %353 = vmatpush1.msra.mxu0 %v352
    %354 = vmatprep.subr.mxu0 0.0
    %v355 = vand.u32 %v36, 4294901760
    %v356 = vsub.f32 %v36, %v355
    %357 = vmatpush1.msra.mxu0 %v356
    %358 = vmatprep.subr.mxu0 0.0
    %359 = vmatpush2.msra.mxu0 0.0
    %360 = vmatprep.subr.mxu0 0.0
    %361 = vmatpush2.msra.mxu0 0.0
    %362 = vmatprep.subr.mxu0 0.0
    %363 = vmatpush2.msra.mxu0 0.0
    %364 = vmatprep.subr.mxu0 0.0
    %365 = vmatpush2.msra.mxu0 0.0
    %366 = vmatprep.subr.mxu0 0.0
    %367 = vmatpush2.msra.mxu0 0.0
    %368 = vmatprep.subr.mxu0 0.0
    %369 = vmatpush2.msra.mxu0 0.0
    %370 = vmatprep.subr.mxu0 0.0
    %371 = vmatpush2.msra.mxu0 0.0
    %372 = vmatprep.subr.mxu0 0.0
    %373 = vmatpush2.msra.mxu0 0.0
    %374 = vmatprep.subr.mxu0 0.0
    %375 = vmatpush2.msra.mxu0 0.0
    %376 = vmatprep.subr.mxu0 0.0
    %377 = vmatpush2.msra.mxu0 0.0
    %378 = vmatprep.subr.mxu0 0.0
    %379 = vmatpush2.msra.mxu0 0.0
    %380 = vmatprep.subr.mxu0 0.0
    %381 = vmatpush2.msra.mxu0 0.0
    %382 = vmatprep.subr.mxu0 0.0
    %383 = vmatpush2.msra.mxu0 0.0
    %384 = vmatprep.subr.mxu0 0.0
    %385 = vmatpush2.msra.mxu0 0.0
    %386 = vmatprep.subr.mxu0 0.0
    %387 = vmatpush2.msra.mxu0 0.0
    %388 = vmatprep.subr.mxu0 0.0
    %389 = vmatpush2.msra.mxu0 0.0
    %390 = vmatprep.mubr.f32.mxu0 0.0
    %v391 = vand.u32 %v35, 4294901760
    %v392 = vsub.f32 %v35, %v391
    %393 = vmatmul.mubr.f32.gmra.mxu0 %v392
    %v394 = vpop.f32.mrf.mxu0
    %v395 = vadd.f32 %v291, %v394
    %v396 = vpop.f32.mrf.mxu0
    %397 = vdwg.mxu0
    %398 = vmatprep.subr.mxu0 0.0
    %v399 = vand.u32 %v51, 4294901760
    %400 = vmatpush1.msra.mxu0 %v399
    %401 = vmatprep.subr.mxu0 0.0
    %v402 = vand.u32 %v50, 4294901760
    %403 = vmatpush1.msra.mxu0 %v402
    %404 = vmatprep.subr.mxu0 0.0
    %v405 = vand.u32 %v49, 4294901760
    %406 = vmatpush1.msra.mxu0 %v405
    %407 = vmatprep.subr.mxu0 0.0
    %v408 = vand.u32 %v48, 4294901760
    %409 = vmatpush1.msra.mxu0 %v408
    %410 = vmatprep.subr.mxu0 0.0
    %v411 = vand.u32 %v47, 4294901760
    %412 = vmatpush1.msra.mxu0 %v411
    %413 = vmatprep.subr.mxu0 0.0
    %v414 = vand.u32 %v46, 4294901760
    %415 = vmatpush1.msra.mxu0 %v414
    %416 = vmatprep.subr.mxu0 0.0
    %v417 = vand.u32 %v45, 4294901760
    %418 = vmatpush1.msra.mxu0 %v417
    %419 = vmatprep.subr.mxu0 0.0
    %v420 = vand.u32 %v44, 4294901760
    %421 = vmatpush1.msra.mxu0 %v420
    %422 = vmatprep.subr.mxu0 0.0
    %v423 = vand.u32 %v43, 4294901760
    %424 = vmatpush1.msra.mxu0 %v423
    %425 = vmatprep.subr.mxu0 0.0
    %v426 = vand.u32 %v42, 4294901760
    %427 = vmatpush1.msra.mxu0 %v426
    %428 = vmatprep.subr.mxu0 0.0
    %v429 = vand.u32 %v41, 4294901760
    %430 = vmatpush1.msra.mxu0 %v429
    %431 = vmatprep.subr.mxu0 0.0
    %v432 = vand.u32 %v40, 4294901760
    %433 = vmatpush1.msra.mxu0 %v432
    %434 = vmatprep.subr.mxu0 0.0
    %v435 = vand.u32 %v39, 4294901760
    %436 = vmatpush1.msra.mxu0 %v435
    %437 = vmatprep.subr.mxu0 0.0
    %v438 = vand.u32 %v38, 4294901760
    %439 = vmatpush1.msra.mxu0 %v438
    %440 = vmatprep.subr.mxu0 0.0
    %v441 = vand.u32 %v37, 4294901760
    %442 = vmatpush1.msra.mxu0 %v441
    %443 = vmatprep.subr.mxu0 0.0
    %v444 = vand.u32 %v36, 4294901760
    %445 = vmatpush1.msra.mxu0 %v444
    %446 = vmatprep.subr.mxu0 0.0
    %447 = vmatpush2.msra.mxu0 0.0
    %448 = vmatprep.subr.mxu0 0.0
    %449 = vmatpush2.msra.mxu0 0.0
    %450 = vmatprep.subr.mxu0 0.0
    %451 = vmatpush2.msra.mxu0 0.0
    %452 = vmatprep.subr.mxu0 0.0
    %453 = vmatpush2.msra.mxu0 0.0
    %454 = vmatprep.subr.mxu0 0.0
    %455 = vmatpush2.msra.mxu0 0.0
    %456 = vmatprep.subr.mxu0 0.0
    %457 = vmatpush2.msra.mxu0 0.0
    %458 = vmatprep.subr.mxu0 0.0
    %459 = vmatpush2.msra.mxu0 0.0
    %460 = vmatprep.subr.mxu0 0.0
    %461 = vmatpush2.msra.mxu0 0.0
    %462 = vmatprep.subr.mxu0 0.0
    %463 = vmatpush2.msra.mxu0 0.0
    %464 = vmatprep.subr.mxu0 0.0
    %465 = vmatpush2.msra.mxu0 0.0
    %466 = vmatprep.subr.mxu0 0.0
    %467 = vmatpush2.msra.mxu0 0.0
    %468 = vmatprep.subr.mxu0 0.0
    %469 = vmatpush2.msra.mxu0 0.0
    %470 = vmatprep.subr.mxu0 0.0
    %471 = vmatpush2.msra.mxu0 0.0
    %472 = vmatprep.subr.mxu0 0.0
    %473 = vmatpush2.msra.mxu0 0.0
    %474 = vmatprep.subr.mxu0 0.0
    %475 = vmatpush2.msra.mxu0 0.0
    %476 = vmatprep.subr.mxu0 0.0
    %477 = vmatpush2.msra.mxu0 0.0
    %478 = vmatprep.mubr.f32.mxu0 0.0
    %v479 = vand.u32 %v35, 4294901760
    %v480 = vsub.f32 %v35, %v479
    %v481 = vand.u32 %v480, 4294901760
    %482 = vmatmul.mubr.f32.gmra.mxu0 %v481
    %v483 = vpop.f32.mrf.mxu0
    %v484 = vadd.f32 %v395, %v483
    %v485 = vpop.f32.mrf.mxu0
    %486 = vdwg.mxu0
    %487 = vmatprep.subr.mxu0 0.0
    %v488 = vand.u32 %v51, 4294901760
    %v489 = vsub.f32 %v51, %v488
    %v490 = vand.u32 %v489, 4294901760
    %491 = vmatpush1.msra.mxu0 %v490
    %492 = vmatprep.subr.mxu0 0.0
    %v493 = vand.u32 %v50, 4294901760
    %v494 = vsub.f32 %v50, %v493
    %v495 = vand.u32 %v494, 4294901760
    %496 = vmatpush1.msra.mxu0 %v495
    %497 = vmatprep.subr.mxu0 0.0
    %v498 = vand.u32 %v49, 4294901760
    %v499 = vsub.f32 %v49, %v498
    %v500 = vand.u32 %v499, 4294901760
    %501 = vmatpush1.msra.mxu0 %v500
    %502 = vmatprep.subr.mxu0 0.0
    %v503 = vand.u32 %v48, 4294901760
    %v504 = vsub.f32 %v48, %v503
    %v505 = vand.u32 %v504, 4294901760
    %506 = vmatpush1.msra.mxu0 %v505
    %507 = vmatprep.subr.mxu0 0.0
    %v508 = vand.u32 %v47, 4294901760
    %v509 = vsub.f32 %v47, %v508
    %v510 = vand.u32 %v509, 4294901760
    %511 = vmatpush1.msra.mxu0 %v510
    %512 = vmatprep.subr.mxu0 0.0
    %v513 = vand.u32 %v46, 4294901760
    %v514 = vsub.f32 %v46, %v513
    %v515 = vand.u32 %v514, 4294901760
    %516 = vmatpush1.msra.mxu0 %v515
    %517 = vmatprep.subr.mxu0 0.0
    %v518 = vand.u32 %v45, 4294901760
    %v519 = vsub.f32 %v45, %v518
    %v520 = vand.u32 %v519, 4294901760
    %521 = vmatpush1.msra.mxu0 %v520
    %522 = vmatprep.subr.mxu0 0.0
    %v523 = vand.u32 %v44, 4294901760
    %v524 = vsub.f32 %v44, %v523
    %v525 = vand.u32 %v524, 4294901760
    %526 = vmatpush1.msra.mxu0 %v525
    %527 = vmatprep.subr.mxu0 0.0
    %v528 = vand.u32 %v43, 4294901760
    %v529 = vsub.f32 %v43, %v528
    %v530 = vand.u32 %v529, 4294901760
    %531 = vmatpush1.msra.mxu0 %v530
    %532 = vmatprep.subr.mxu0 0.0
    %v533 = vand.u32 %v42, 4294901760
    %v534 = vsub.f32 %v42, %v533
    %v535 = vand.u32 %v534, 4294901760
    %536 = vmatpush1.msra.mxu0 %v535
    %537 = vmatprep.subr.mxu0 0.0
    %v538 = vand.u32 %v41, 4294901760
    %v539 = vsub.f32 %v41, %v538
    %v540 = vand.u32 %v539, 4294901760
    %541 = vmatpush1.msra.mxu0 %v540
    %542 = vmatprep.subr.mxu0 0.0
    %v543 = vand.u32 %v40, 4294901760
    %v544 = vsub.f32 %v40, %v543
    %v545 = vand.u32 %v544, 4294901760
    %546 = vmatpush1.msra.mxu0 %v545
    %547 = vmatprep.subr.mxu0 0.0
    %v548 = vand.u32 %v39, 4294901760
    %v549 = vsub.f32 %v39, %v548
    %v550 = vand.u32 %v549, 4294901760
    %551 = vmatpush1.msra.mxu0 %v550
    %552 = vmatprep.subr.mxu0 0.0
    %v553 = vand.u32 %v38, 4294901760
    %v554 = vsub.f32 %v38, %v553
    %v555 = vand.u32 %v554, 4294901760
    %556 = vmatpush1.msra.mxu0 %v555
    %557 = vmatprep.subr.mxu0 0.0
    %v558 = vand.u32 %v37, 4294901760
    %v559 = vsub.f32 %v37, %v558
    %v560 = vand.u32 %v559, 4294901760
    %561 = vmatpush1.msra.mxu0 %v560
    %562 = vmatprep.subr.mxu0 0.0
    %v563 = vand.u32 %v36, 4294901760
    %v564 = vsub.f32 %v36, %v563
    %v565 = vand.u32 %v564, 4294901760
    %566 = vmatpush1.msra.mxu0 %v565
    %567 = vmatprep.subr.mxu0 0.0
    %568 = vmatpush2.msra.mxu0 0.0
    %569 = vmatprep.subr.mxu0 0.0
    %570 = vmatpush2.msra.mxu0 0.0
    %571 = vmatprep.subr.mxu0 0.0
    %572 = vmatpush2.msra.mxu0 0.0
    %573 = vmatprep.subr.mxu0 0.0
    %574 = vmatpush2.msra.mxu0 0.0
    %575 = vmatprep.subr.mxu0 0.0
    %576 = vmatpush2.msra.mxu0 0.0
    %577 = vmatprep.subr.mxu0 0.0
    %578 = vmatpush2.msra.mxu0 0.0
    %579 = vmatprep.subr.mxu0 0.0
    %580 = vmatpush2.msra.mxu0 0.0
    %581 = vmatprep.subr.mxu0 0.0
    %582 = vmatpush2.msra.mxu0 0.0
    %583 = vmatprep.subr.mxu0 0.0
    %584 = vmatpush2.msra.mxu0 0.0
    %585 = vmatprep.subr.mxu0 0.0
    %586 = vmatpush2.msra.mxu0 0.0
    %587 = vmatprep.subr.mxu0 0.0
    %588 = vmatpush2.msra.mxu0 0.0
    %589 = vmatprep.subr.mxu0 0.0
    %590 = vmatpush2.msra.mxu0 0.0
    %591 = vmatprep.subr.mxu0 0.0
    %592 = vmatpush2.msra.mxu0 0.0
    %593 = vmatprep.subr.mxu0 0.0
    %594 = vmatpush2.msra.mxu0 0.0
    %595 = vmatprep.subr.mxu0 0.0
    %596 = vmatpush2.msra.mxu0 0.0
    %597 = vmatprep.subr.mxu0 0.0
    %598 = vmatpush2.msra.mxu0 0.0
    %599 = vmatprep.mubr.f32.mxu0 0.0
    %v600 = vand.u32 %v35, 4294901760
    %601 = vmatmul.mubr.f32.gmra.mxu0 %v600
    %v602 = vpop.f32.mrf.mxu0
    %v603 = vadd.f32 %v484, %v602
    %v604 = vpop.f32.mrf.mxu0
    %605 = vdwg.mxu0
    %606 = vmatprep.subr.mxu0 0.0
    %v607 = vand.u32 %v51, 4294901760
    %608 = vmatpush1.msra.mxu0 %v607
    %609 = vmatprep.subr.mxu0 0.0
    %v610 = vand.u32 %v50, 4294901760
    %611 = vmatpush1.msra.mxu0 %v610
    %612 = vmatprep.subr.mxu0 0.0
    %v613 = vand.u32 %v49, 4294901760
    %614 = vmatpush1.msra.mxu0 %v613
    %615 = vmatprep.subr.mxu0 0.0
    %v616 = vand.u32 %v48, 4294901760
    %617 = vmatpush1.msra.mxu0 %v616
    %618 = vmatprep.subr.mxu0 0.0
    %v619 = vand.u32 %v47, 4294901760
    %620 = vmatpush1.msra.mxu0 %v619
    %621 = vmatprep.subr.mxu0 0.0
    %v622 = vand.u32 %v46, 4294901760
    %623 = vmatpush1.msra.mxu0 %v622
    %624 = vmatprep.subr.mxu0 0.0
    %v625 = vand.u32 %v45, 4294901760
    %626 = vmatpush1.msra.mxu0 %v625
    %627 = vmatprep.subr.mxu0 0.0
    %v628 = vand.u32 %v44, 4294901760
    %629 = vmatpush1.msra.mxu0 %v628
    %630 = vmatprep.subr.mxu0 0.0
    %v631 = vand.u32 %v43, 4294901760
    %632 = vmatpush1.msra.mxu0 %v631
    %633 = vmatprep.subr.mxu0 0.0
    %v634 = vand.u32 %v42, 4294901760
    %635 = vmatpush1.msra.mxu0 %v634
    %636 = vmatprep.subr.mxu0 0.0
    %v637 = vand.u32 %v41, 4294901760
    %638 = vmatpush1.msra.mxu0 %v637
    %639 = vmatprep.subr.mxu0 0.0
    %v640 = vand.u32 %v40, 4294901760
    %641 = vmatpush1.msra.mxu0 %v640
    %642 = vmatprep.subr.mxu0 0.0
    %v643 = vand.u32 %v39, 4294901760
    %644 = vmatpush1.msra.mxu0 %v643
    %645 = vmatprep.subr.mxu0 0.0
    %v646 = vand.u32 %v38, 4294901760
    %647 = vmatpush1.msra.mxu0 %v646
    %648 = vmatprep.subr.mxu0 0.0
    %v649 = vand.u32 %v37, 4294901760
    %650 = vmatpush1.msra.mxu0 %v649
    %651 = vmatprep.subr.mxu0 0.0
    %v652 = vand.u32 %v36, 4294901760
    %653 = vmatpush1.msra.mxu0 %v652
    %654 = vmatprep.subr.mxu0 0.0
    %655 = vmatpush2.msra.mxu0 0.0
    %656 = vmatprep.subr.mxu0 0.0
    %657 = vmatpush2.msra.mxu0 0.0
    %658 = vmatprep.subr.mxu0 0.0
    %659 = vmatpush2.msra.mxu0 0.0
    %660 = vmatprep.subr.mxu0 0.0
    %661 = vmatpush2.msra.mxu0 0.0
    %662 = vmatprep.subr.mxu0 0.0
    %663 = vmatpush2.msra.mxu0 0.0
    %664 = vmatprep.subr.mxu0 0.0
    %665 = vmatpush2.msra.mxu0 0.0
    %666 = vmatprep.subr.mxu0 0.0
    %667 = vmatpush2.msra.mxu0 0.0
    %668 = vmatprep.subr.mxu0 0.0
    %669 = vmatpush2.msra.mxu0 0.0
    %670 = vmatprep.subr.mxu0 0.0
    %671 = vmatpush2.msra.mxu0 0.0
    %672 = vmatprep.subr.mxu0 0.0
    %673 = vmatpush2.msra.mxu0 0.0
    %674 = vmatprep.subr.mxu0 0.0
    %675 = vmatpush2.msra.mxu0 0.0
    %676 = vmatprep.subr.mxu0 0.0
    %677 = vmatpush2.msra.mxu0 0.0
    %678 = vmatprep.subr.mxu0 0.0
    %679 = vmatpush2.msra.mxu0 0.0
    %680 = vmatprep.subr.mxu0 0.0
    %681 = vmatpush2.msra.mxu0 0.0
    %682 = vmatprep.subr.mxu0 0.0
    %683 = vmatpush2.msra.mxu0 0.0
    %684 = vmatprep.subr.mxu0 0.0
    %685 = vmatpush2.msra.mxu0 0.0
    %686 = vmatprep.mubr.f32.mxu0 0.0
    %v687 = vand.u32 %v35, 4294901760
    %688 = vmatmul.mubr.f32.gmra.mxu0 %v687
    %v689 = vpop.f32.mrf.mxu0
    %v690 = vadd.f32 %v603, %v689
    %v691 = vpop.f32.mrf.mxu0
    %692 = vdwg.mxu0
    %v693 = vadd.f32 %v34, %v690
    %694 = vst [vmem:[#allocation2] sm:$0xff] %v693
    // Predicated region
    $region22: #{gelu_layer.1} parent=1 // pred_check
      %p695 = pneg %p29
    $region23: #{gelu_layer.1} parent=1 // pred_check_branch
      %697 = sbr.rel (%p695) target = $region25
    $region24: #{gelu_layer.1} parent=1 // pred_region
      %v698 = vld [vmem:[#allocation2] sm:$0xff]
      %v699 = vld [vmem:[%s2] sm:$0x1]
      %v701 = vlaneseq
      %v702 = vshrl.u32 %v701, 7
      %v703 = vsub.s32 0, %v702
      %v704 = vrot.slane %v699, %v703
      %v706 = vadd.f32 %v698, %v704
      %v707 = vmul.f32 %v706, 0.5
      %v708 = vmul.f32 %v706, 0.70710677
      %v709 = verf.f32.pop %v708
      %v710 = vadd.f32 %v709, 1.0
      %v711 = vmul.f32 %v707, %v710
      %712 = vst [vmem:[#allocation6] sm:$0xff] %v711
    $region25: #{gelu_layer.1} parent=1 // pred_fallthru
      _
    // Predicated region
    $region26: #{gelu_layer.1} parent=1 // pred_check
      _
    $region27: #{gelu_layer.1} parent=1 // pred_check_branch
      %714 = sbr.rel (0) target = $region29
    $region28: #{gelu_layer.1} parent=1 // pred_region
      %s716 = ssub.s32 128, 128
      %717 = vsyncadd [#allocation5], %s716
      %s719 = sshll.u32 [#allocation6], 4
      %s720 = int_to_ptr.vmem [resolvable:$true] %s719
      %722 = dma.vmem_to_hbm [thread:$0]  %s720, 128, %s3, [#allocation5]
    $region29: #{gelu_layer.1} parent=1 // pred_fallthru
      _
    // Predicated region
    $region30: #{gelu_layer.1} parent=1 // pred_check
      _
    $region31: #{gelu_layer.1} parent=1 // pred_check_branch
      %724 = sbr.rel (0) target = $region33
    $region32: #{gelu_layer.1} parent=1 // pred_region
      %725 = dma.done [#allocation5], 128
    $region33: #{gelu_layer.1} parent=1 // pred_fallthru
      _
    %726 = vsyncpa [#allocation4], 1
    %727 = vsyncpa [#allocation5], 1

</llo_original>
